<compile_context>
chip_gen: v7x
topology: tpu7x:2x2x1
jax: 0.10.0
libtpu: 0.0.40
codegen_flags: <defaults>
</compile_context>

<pallas_src>
import jax
import jax.numpy as jnp
from jax import lax
from jax.experimental import pallas as pl
from jax.experimental.pallas import tpu as pltpu

DROP_P = 0.2
KEEP_SCALE = 1.0 / (1.0 - DROP_P)
# Integer-domain dropout threshold: keep element iff u32 bits >= 0.2 * 2^32.
DROP_THRESHOLD = int(DROP_P * (1 << 32))  # 858993459


def model_kernel(scale_ref, x_ref, w_ref, bits_ref, o_ref):
    x = x_ref[...]                                               # (B, 16)
    w = w_ref[...]                                               # (16, 32)

    # v1 = embed(x)   (Linear, bias=False)
    v1 = jnp.dot(x, w, preferred_element_type=jnp.float32)       # (B, 32)

    # v3 = v1 @ v1.T — contract both operands on their last dim directly so
    # the MXU stays on its native last-dim-contraction path (no XLU transpose
    # / materialized copy).
    s = lax.dot_general(
        v1, v1,
        dimension_numbers=(((1,), (1,)), ((), ())),
        preferred_element_type=jnp.float32)                      # (B, B)

    # v5 = v3 / scale — one scalar SMEM read + scalar reciprocal, then a
    # single vector multiply (no full-vreg broadcast of the scale).
    inv_scale = 1.0 / scale_ref[0]
    s = s * inv_scale

    # v6 = softmax(v5, axis=-1)  (numerically stable)
    m = jnp.max(s, axis=-1, keepdims=True)
    e = jnp.exp(s - m)
    denom = jnp.sum(e, axis=-1, keepdims=True)
    p = e * (1.0 / denom)                                        # (B, B)

    # v7 = dropout(v6, p=0.2, training=True)
    # Random bits have exactly p's shape (no hardcoded (8,128) draw, no OOB
    # slice for B > 8) and are compared in the integer domain: P(keep) = 0.8.
    # TODO(synk): PyTorch's dropout RNG stream is not reproduced bit-for-bit;
    # this is equivalence-in-distribution only.
    keep = (bits_ref[...] >= jnp.uint32(DROP_THRESHOLD)).astype(jnp.float32)
    v7 = p * keep * KEEP_SCALE

    # v8 = v7 @ v1
    o_ref[...] = jnp.dot(v7, v1, preferred_element_type=jnp.float32)


def model_forward(x, w, scale, dropout_key):
    B = x.shape[0]
    out_f = w.shape[1]
    # Dropout randomness generated outside the kernel (works on TPU and in
    # interpret mode); thresholding + rescaling stay fused inside the kernel.
    bits = jax.random.bits(dropout_key, (B, B), dtype=jnp.uint32)
    return pl.pallas_call(
        model_kernel,
        out_shape=jax.ShapeDtypeStruct((B, out_f), jnp.float32),
        in_specs=[
            pl.BlockSpec(memory_space=pltpu.MemorySpace.SMEM),   # scale (1,)
            pl.BlockSpec(memory_space=pltpu.MemorySpace.VMEM),   # x     (B,16)
            pl.BlockSpec(memory_space=pltpu.MemorySpace.VMEM),   # w     (16,32)
            pl.BlockSpec(memory_space=pltpu.MemorySpace.VMEM),   # bits  (B,B) u32
        ],
        out_specs=pl.BlockSpec(memory_space=pltpu.MemorySpace.VMEM),
    )(scale, x, w, bits)


if __name__ == "__main__":
    key = jax.random.PRNGKey(0)
    kx, kw, kd = jax.random.split(key, 3)

    # Module shapes: Linear(16, 32, bias=False); input x1: (2, 16)
    B, IN, OUT = 2, 16, 32
    x = jax.random.normal(kx, (B, IN), dtype=jnp.float32)
    # Deterministic weight init (stored as (in, out) == PyTorch weight.T)
    w = jax.random.normal(kw, (IN, OUT), dtype=jnp.float32) * (1.0 / jnp.sqrt(IN))
    scale = jnp.array([2000.0], dtype=jnp.float32)

    out = model_forward(x, w, scale, kd)
    jax.block_until_ready(out)
    assert out.shape == (B, OUT) and out.dtype == jnp.float32
    assert bool(jnp.all(jnp.isfinite(out)))
    print("KERNEL_OK")
</pallas_src>

<mosaic_0001>
module attributes {stable_mosaic.version = 11 : i64} {
  func.func @model_kernel(%arg0: memref<1xf32, #tpu.memory_space<smem>>, %arg1: memref<2x16xf32, #tpu.memory_space<vmem>>, %arg2: memref<16x32xf32, #tpu.memory_space<vmem>>, %arg3: memref<2x2xi32, #tpu.memory_space<vmem>>, %arg4: memref<2x32xf32, #tpu.memory_space<vmem>>) attributes {dimension_semantics = [], scalar_prefetch = 0 : i64, scratch_operands = 0 : i64, tpu.core_type = #tpu.core_type<tc>} {
    %c0 = arith.constant 0 : index
    %c0_0 = arith.constant 0 : index
    %0 = vector.load %arg1[%c0, %c0_0] : memref<2x16xf32, #tpu.memory_space<vmem>>, vector<2x16xf32>
    %c0_1 = arith.constant 0 : index
    %c0_2 = arith.constant 0 : index
    %1 = vector.load %arg2[%c0_1, %c0_2] : memref<16x32xf32, #tpu.memory_space<vmem>>, vector<16x32xf32>
    %cst = arith.constant dense<0.000000e+00> : vector<2x32xf32>
    %2 = tpu.matmul %0, %1, %cst {dimension_numbers = #tpu.dot_dimension_numbers<[1], [0], [0], [1], [0, 0, 1, 1], [], []>} : vector<2x16xf32>, vector<16x32xf32>, vector<2x32xf32> -> vector<2x32xf32>
    %cst_3 = arith.constant dense<0.000000e+00> : vector<2x2xf32>
    %3 = tpu.matmul %2, %2, %cst_3 {dimension_numbers = #tpu.dot_dimension_numbers<[1], [1], [0], [0], [0, 0, 1, 0], [], []>} : vector<2x32xf32>, vector<2x32xf32>, vector<2x2xf32> -> vector<2x2xf32>
    %c0_4 = arith.constant 0 : index
    %4 = memref.load %arg0[%c0_4] : memref<1xf32, #tpu.memory_space<smem>>
    %cst_5 = arith.constant 1.000000e+00 : f32
    %5 = arith.divf %cst_5, %4 : f32
    %6 = vector.broadcast %5 : f32 to vector<2x2xf32>
    %7 = arith.mulf %3, %6 : vector<2x2xf32>
    %cst_6 = arith.constant dense<0xFF800000> : vector<2xf32>
    %8 = vector.multi_reduction <maximumf>, %7, %cst_6 [1] : vector<2x2xf32> to vector<2xf32>
    %9 = vector.shape_cast %8 : vector<2xf32> to vector<2x1xf32>
    %10 = vector.broadcast %9 : vector<2x1xf32> to vector<2x2xf32>
    %11 = arith.subf %7, %10 : vector<2x2xf32>
    %12 = math.exp %11 : vector<2x2xf32>
    %cst_7 = arith.constant dense<0.000000e+00> : vector<2xf32>
    %13 = vector.multi_reduction <add>, %12, %cst_7 [1] : vector<2x2xf32> to vector<2xf32>
    %14 = vector.shape_cast %13 : vector<2xf32> to vector<2x1xf32>
    %cst_8 = arith.constant 1.000000e+00 : f32
    %15 = vector.broadcast %cst_8 : f32 to vector<2x1xf32>
    %16 = arith.divf %15, %14 : vector<2x1xf32>
    %17 = vector.broadcast %16 : vector<2x1xf32> to vector<2x2xf32>
    %18 = arith.mulf %12, %17 : vector<2x2xf32>
    %c0_9 = arith.constant 0 : index
    %c0_10 = arith.constant 0 : index
    %19 = vector.load %arg3[%c0_9, %c0_10] : memref<2x2xi32, #tpu.memory_space<vmem>>, vector<2x2xi32>
    %c858993459_i32 = arith.constant 858993459 : i32
    %20 = vector.broadcast %c858993459_i32 : i32 to vector<2x2xi32>
    %21 = arith.cmpi uge, %19, %20 : vector<2x2xi32>
    %22 = arith.extui %21 : vector<2x2xi1> to vector<2x2xi32>
    %23 = arith.sitofp %22 : vector<2x2xi32> to vector<2x2xf32>
    %24 = arith.mulf %18, %23 : vector<2x2xf32>
    %cst_11 = arith.constant 1.250000e+00 : f32
    %25 = vector.broadcast %cst_11 : f32 to vector<2x2xf32>
    %26 = arith.mulf %24, %25 : vector<2x2xf32>
    %cst_12 = arith.constant dense<0.000000e+00> : vector<2x32xf32>
    %27 = tpu.matmul %26, %2, %cst_12 {dimension_numbers = #tpu.dot_dimension_numbers<[1], [0], [0], [1], [0, 0, 1, 1], [], []>} : vector<2x2xf32>, vector<2x32xf32>, vector<2x32xf32> -> vector<2x32xf32>
    %c0_13 = arith.constant 0 : index
    %c0_14 = arith.constant 0 : index
    %28 = vector.load %arg4[%c0_13, %c0_14] : memref<2x32xf32, #tpu.memory_space<vmem>>, vector<2x32xf32>
    tpu.vector_store %arg4[%c0_13, %c0_14], %27 {strides = array<i32>} : memref<2x32xf32, #tpu.memory_space<vmem>>, vector<2x32xf32>,
    return
  }
}

</mosaic_0001>

<llo_original>
// kernel: tpu_custom_call.1
$region0: #{tpu_custom_call.1}
  #allocation0 [shape = 'u32[]', space=smem, size = 0x4, offset = 0x4, fixed_abs, tag = 'smem constant byte address 0x4 - core index']
  #allocation1 [shape = 'u32[144,128]{1,0:T(1,128)}', space=vmem, size = 0x12000, scoped, tag = 'internal scratch']
  #allocation2 [shape = 'f32[1]{0:T(128)S(6)}', space=smem, size = 0x200, scoped, tag = 'scoped memory for tpu_custom_call.1']
  %s0 = inlined_call_operand.<no memory space> [shape: f32[1], index: 0, kind: input, shape index: {}]
  %s1 = inlined_call_operand.vmem [shape: f32[2,16], index: 1, kind: input, shape index: {}]
  %s2 = inlined_call_operand.hbm [shape: f32[16,32], index: 2, kind: input, shape index: {}]
  %s3 = inlined_call_operand.vmem [shape: u32[2,2], index: 3, kind: input, shape index: {}]
  %s4 = inlined_call_operand.hbm [shape: f32[2,32], index: 4, kind: output, shape index: {}]
  %s5 = sld [smem:[#allocation0]]
  $region30: #{tpu_custom_call.1} parent=0
    _
  %s7 = ssub.s32 1, %s5
  %s8 = scalar_select 0, %s7, %s5
  %9 = sst [smem:[#allocation2]] %s0
  $region1: #{tpu_custom_call.1} parent=0
    #allocation3 [shape = 'u8[8192]{0}', space=vmem, size = 0x2000, scoped, tag = 'input window, operand 2, single buffered']
    #allocation4 [shape = 's32[1]{0}', space=sflag, size = 0x4, scoped, tag = 'scoped memory for tpu_custom_call.1']
    #allocation5 [shape = 's32[1]{0}', space=sflag, size = 0x4, scoped, tag = 'scoped memory for tpu_custom_call.1']
    #allocation6 [shape = 'u8[1024]{0}', space=vmem, size = 0x400, scoped, tag = 'output window, operand 0, single buffered']
    %10 = vsyncpa [#allocation4], 0
    %11 = vsyncpa [#allocation5], 0
    // Predicated region
    $region2: #{tpu_custom_call.1} parent=1 // pred_check
      _
    $region3: #{tpu_custom_call.1} parent=1 // pred_check_branch
      %13 = sbr.rel (0) target = $region5
    $region4: #{tpu_custom_call.1} parent=1 // pred_region
      _
    $region5: #{tpu_custom_call.1} parent=1 // pred_fallthru
      _
    // Predicated region
    $region6: #{tpu_custom_call.1} parent=1 // pred_check
      _
    $region7: #{tpu_custom_call.1} parent=1 // pred_check_branch
      %15 = sbr.rel (0) target = $region9
    $region8: #{tpu_custom_call.1} parent=1 // pred_region
      _
    $region9: #{tpu_custom_call.1} parent=1 // pred_fallthru
      _
    // Predicated region
    $region10: #{tpu_custom_call.1} parent=1 // pred_check
      _
    $region11: #{tpu_custom_call.1} parent=1 // pred_check_branch
      %17 = sbr.rel (0) target = $region13
    $region12: #{tpu_custom_call.1} parent=1 // pred_region
      %s19 = ssub.s32 256, 256
      %20 = vsyncadd [#allocation4], %s19
      %s21 = sshll.u32 [#allocation3], 4
      %s22 = int_to_ptr.vmem [resolvable:$true] %s21
      %27 = dma.hbm_to_vmem [thread:$0]  %s2, 256, %s22, [#allocation4], 128, 128, 8
    $region13: #{tpu_custom_call.1} parent=1 // pred_fallthru
      _
    // Predicated region
    $region14: #{tpu_custom_call.1} parent=1 // pred_check
      _
    $region15: #{tpu_custom_call.1} parent=1 // pred_check_branch
      %29 = sbr.rel (0) target = $region17
    $region16: #{tpu_custom_call.1} parent=1 // pred_region
      _
    $region17: #{tpu_custom_call.1} parent=1 // pred_fallthru
      _
    // Predicated region
    $region18: #{tpu_custom_call.1} parent=1 // pred_check
      _
    $region19: #{tpu_custom_call.1} parent=1 // pred_check_branch
      %31 = sbr.rel (0) target = $region21
    $region20: #{tpu_custom_call.1} parent=1 // pred_region
      %32 = dma.done [#allocation4], 256
    $region21: #{tpu_custom_call.1} parent=1 // pred_fallthru
      _
    %v33 = vld [vmem:[%s1] sm:$0x3]
    %v34 = vld [vmem:[#allocation3] sm:$0xff]
    %v35 = vld [vmem:[#allocation3 + $0x8] sm:$0xff]
    %vm36 = vcmask 130048
    %v38 = vsel %vm36, %v33, 0
    %40 = vmatprep.subr.mxu0 0.0
    %41 = vmatpush1.msra.mxu0 %v34
    %42 = vmatprep.subr.mxu0 0.0
    %43 = vmatpush1.msra.mxu0 %v35
    %44 = vmatprep.subr.mxu0 0.0
    %45 = vmatpush1.msra.mxu0 0.0
    %46 = vmatprep.subr.mxu0 0.0
    %47 = vmatpush1.msra.mxu0 0.0
    %48 = vmatprep.subr.mxu0 0.0
    %49 = vmatpush1.msra.mxu0 0.0
    %50 = vmatprep.subr.mxu0 0.0
    %51 = vmatpush1.msra.mxu0 0.0
    %52 = vmatprep.subr.mxu0 0.0
    %53 = vmatpush1.msra.mxu0 0.0
    %54 = vmatprep.subr.mxu0 0.0
    %55 = vmatpush1.msra.mxu0 0.0
    %56 = vmatprep.subr.mxu0 0.0
    %57 = vmatpush1.msra.mxu0 0.0
    %58 = vmatprep.subr.mxu0 0.0
    %59 = vmatpush1.msra.mxu0 0.0
    %60 = vmatprep.subr.mxu0 0.0
    %61 = vmatpush1.msra.mxu0 0.0
    %62 = vmatprep.subr.mxu0 0.0
    %63 = vmatpush1.msra.mxu0 0.0
    %64 = vmatprep.subr.mxu0 0.0
    %65 = vmatpush1.msra.mxu0 0.0
    %66 = vmatprep.subr.mxu0 0.0
    %67 = vmatpush1.msra.mxu0 0.0
    %68 = vmatprep.subr.mxu0 0.0
    %69 = vmatpush1.msra.mxu0 0.0
    %70 = vmatprep.subr.mxu0 0.0
    %71 = vmatpush1.msra.mxu0 0.0
    %72 = vmatprep.subr.mxu0 0.0
    %73 = vmatpush1.msra.mxu0 0.0
    %74 = vmatprep.subr.mxu0 0.0
    %75 = vmatpush1.msra.mxu0 0.0
    %76 = vmatprep.subr.mxu0 0.0
    %77 = vmatpush1.msra.mxu0 0.0
    %78 = vmatprep.subr.mxu0 0.0
    %79 = vmatpush1.msra.mxu0 0.0
    %80 = vmatprep.subr.mxu0 0.0
    %81 = vmatpush1.msra.mxu0 0.0
    %82 = vmatprep.subr.mxu0 0.0
    %83 = vmatpush1.msra.mxu0 0.0
    %84 = vmatprep.subr.mxu0 0.0
    %85 = vmatpush1.msra.mxu0 0.0
    %86 = vmatprep.subr.mxu0 0.0
    %87 = vmatpush1.msra.mxu0 0.0
    %88 = vmatprep.subr.mxu0 0.0
    %89 = vmatpush1.msra.mxu0 0.0
    %90 = vmatprep.subr.mxu0 0.0
    %91 = vmatpush1.msra.mxu0 0.0
    %92 = vmatprep.subr.mxu0 0.0
    %93 = vmatpush1.msra.mxu0 0.0
    %94 = vmatprep.subr.mxu0 0.0
    %95 = vmatpush1.msra.mxu0 0.0
    %96 = vmatprep.subr.mxu0 0.0
    %97 = vmatpush1.msra.mxu0 0.0
    %98 = vmatprep.subr.mxu0 0.0
    %99 = vmatpush1.msra.mxu0 0.0
    %100 = vmatprep.subr.mxu0 0.0
    %101 = vmatpush1.msra.mxu0 0.0
    %102 = vmatprep.subr.mxu0 0.0
    %103 = vmatpush1.msra.mxu0 0.0
    %104 = vmatprep.mubr.f32.mxu0 0.0
    %105 = vmatmul.mubr.f32.gmra.mrb[0].mxu0 %v38
    %v106 = vpop.f32.mrb[0].mxu0
    %v107 = vadd.f32 0.0, %v106
    %v108 = vpop.f32.mrb[0].mxu0
    %109 = vdwg.mxu0
    %vm110 = vcmask 261120
    %v112 = vsel %vm110, %v107, 0
    %114 = vmatprep.subr.mxu0 0.0
    %115 = vmatpush1.xpose.msra.mxu0 %v112
    %116 = vmatprep.subr.mxu0 0.0
    %117 = vmatpush1.xpose.msra.mxu0 0.0
    %118 = vmatprep.subr.mxu0 0.0
    %119 = vmatpush1.xpose.msra.mxu0 0.0
    %120 = vmatprep.subr.mxu0 0.0
    %121 = vmatpush1.xpose.msra.mxu0 0.0
    %122 = vmatprep.subr.mxu0 0.0
    %123 = vmatpush1.xpose.msra.mxu0 0.0
    %124 = vmatprep.subr.mxu0 0.0
    %125 = vmatpush1.xpose.msra.mxu0 0.0
    %126 = vmatprep.subr.mxu0 0.0
    %127 = vmatpush1.xpose.msra.mxu0 0.0
    %128 = vmatprep.subr.mxu0 0.0
    %129 = vmatpush1.xpose.msra.mxu0 0.0
    %130 = vmatprep.subr.mxu0 0.0
    %131 = vmatpush1.xpose.msra.mxu0 0.0
    %132 = vmatprep.subr.mxu0 0.0
    %133 = vmatpush1.xpose.msra.mxu0 0.0
    %134 = vmatprep.subr.mxu0 0.0
    %135 = vmatpush1.xpose.msra.mxu0 0.0
    %136 = vmatprep.subr.mxu0 0.0
    %137 = vmatpush1.xpose.msra.mxu0 0.0
    %138 = vmatprep.subr.mxu0 0.0
    %139 = vmatpush1.xpose.msra.mxu0 0.0
    %140 = vmatprep.subr.mxu0 0.0
    %141 = vmatpush1.xpose.msra.mxu0 0.0
    %142 = vmatprep.subr.mxu0 0.0
    %143 = vmatpush1.xpose.msra.mxu0 0.0
    %144 = vmatprep.subr.mxu0 0.0
    %145 = vmatpush1.xpose.msra.mxu0 0.0
    %146 = vmatprep.subr.mxu0 0.0
    %147 = vmatpush1.xpose.msra.mxu0 0.0
    %148 = vmatprep.subr.mxu0 0.0
    %149 = vmatpush1.xpose.msra.mxu0 0.0
    %150 = vmatprep.subr.mxu0 0.0
    %151 = vmatpush1.xpose.msra.mxu0 0.0
    %152 = vmatprep.subr.mxu0 0.0
    %153 = vmatpush1.xpose.msra.mxu0 0.0
    %154 = vmatprep.subr.mxu0 0.0
    %155 = vmatpush1.xpose.msra.mxu0 0.0
    %156 = vmatprep.subr.mxu0 0.0
    %157 = vmatpush1.xpose.msra.mxu0 0.0
    %158 = vmatprep.subr.mxu0 0.0
    %159 = vmatpush1.xpose.msra.mxu0 0.0
    %160 = vmatprep.subr.mxu0 0.0
    %161 = vmatpush1.xpose.msra.mxu0 0.0
    %162 = vmatprep.subr.mxu0 0.0
    %163 = vmatpush1.xpose.msra.mxu0 0.0
    %164 = vmatprep.subr.mxu0 0.0
    %165 = vmatpush1.xpose.msra.mxu0 0.0
    %166 = vmatprep.subr.mxu0 0.0
    %167 = vmatpush1.xpose.msra.mxu0 0.0
    %168 = vmatprep.subr.mxu0 0.0
    %169 = vmatpush1.xpose.msra.mxu0 0.0
    %170 = vmatprep.subr.mxu0 0.0
    %171 = vmatpush1.xpose.msra.mxu0 0.0
    %172 = vmatprep.subr.mxu0 0.0
    %173 = vmatpush1.xpose.msra.mxu0 0.0
    %174 = vmatprep.subr.mxu0 0.0
    %175 = vmatpush1.xpose.msra.mxu0 0.0
    %176 = vmatprep.subr.mxu0 0.0
    %177 = vmatpush1.xpose.msra.mxu0 0.0
    %178 = vmatprep.mubr.f32.mxu0 0.0
    %179 = vmatmul.mubr.f32.gmra.mrb[0].mxu0 %v112
    %v180 = vpop.f32.mrb[0].mxu0
    %v181 = vadd.f32 0.0, %v180
    %v182 = vpop.f32.mrb[0].mxu0
    %183 = vdwg.mxu0
    %s184 = sld [smem:[#allocation2]]
    %v185 = vstv %s184
    %v186 = vrcp.pop %v185
    %s187 = vtos %v186
    %v188 = vstv %s187
    %v189 = vmul.f32 %v181, %v188
    %vm190 = vcmask 9216
    %v191 = vsel %vm190, %v189, -inf
    %192 = vmax.xlane.f32.xlu0 %v191
    %v193 = vpop.xlane.xlu0 %192
    %v194 = vsub.f32 %v189, %v193
    %v195 = vmul.f32 %v194, 1.442695
    %v196 = vpow.pop %v195
    %v197 = vsel %vm190, %v196, 0.0
    %198 = vadd.xlane.f32.xlu0 %v197
    %v199 = vpop.xlane.xlu0 %198
    %v200 = vrcp.pop %v199
    %v201 = vmul.f32 1.0, %v200
    %v202 = vmul.f32 %v196, %v201
    %v203 = vld [vmem:[%s3] sm:$0x3]
    %vm204 = vcmp.ge.u32.totalorder %v203, 858993459
    %v205 = vsel %vm204, 1, 0
    %v206 = vcvt.s32.f32 %v205
    %v207 = vmul.f32 %v202, %v206
    %v208 = vmul.f32 %v207, 1.25
    %vm209 = vcmask 15360
    %v211 = vsel %vm209, %v208, 0
    %vm213 = vcmask 1041408
    %v214 = vsel %vm213, %v107, 0
    %216 = vmatprep.subr.mxu0 0.0
    %217 = vmatpush1.msra.mxu0 %v214
    %218 = vmatprep.subr.mxu0 0.0
    %219 = vmatpush1.msra.mxu0 0.0
    %220 = vmatprep.subr.mxu0 0.0
    %221 = vmatpush1.msra.mxu0 0.0
    %222 = vmatprep.subr.mxu0 0.0
    %223 = vmatpush1.msra.mxu0 0.0
    %224 = vmatprep.subr.mxu0 0.0
    %225 = vmatpush1.msra.mxu0 0.0
    %226 = vmatprep.subr.mxu0 0.0
    %227 = vmatpush1.msra.mxu0 0.0
    %228 = vmatprep.subr.mxu0 0.0
    %229 = vmatpush1.msra.mxu0 0.0
    %230 = vmatprep.subr.mxu0 0.0
    %231 = vmatpush1.msra.mxu0 0.0
    %232 = vmatprep.subr.mxu0 0.0
    %233 = vmatpush1.msra.mxu0 0.0
    %234 = vmatprep.subr.mxu0 0.0
    %235 = vmatpush1.msra.mxu0 0.0
    %236 = vmatprep.subr.mxu0 0.0
    %237 = vmatpush1.msra.mxu0 0.0
    %238 = vmatprep.subr.mxu0 0.0
    %239 = vmatpush1.msra.mxu0 0.0
    %240 = vmatprep.subr.mxu0 0.0
    %241 = vmatpush1.msra.mxu0 0.0
    %242 = vmatprep.subr.mxu0 0.0
    %243 = vmatpush1.msra.mxu0 0.0
    %244 = vmatprep.subr.mxu0 0.0
    %245 = vmatpush1.msra.mxu0 0.0
    %246 = vmatprep.subr.mxu0 0.0
    %247 = vmatpush1.msra.mxu0 0.0
    %248 = vmatprep.subr.mxu0 0.0
    %249 = vmatpush1.msra.mxu0 0.0
    %250 = vmatprep.subr.mxu0 0.0
    %251 = vmatpush1.msra.mxu0 0.0
    %252 = vmatprep.subr.mxu0 0.0
    %253 = vmatpush1.msra.mxu0 0.0
    %254 = vmatprep.subr.mxu0 0.0
    %255 = vmatpush1.msra.mxu0 0.0
    %256 = vmatprep.subr.mxu0 0.0
    %257 = vmatpush1.msra.mxu0 0.0
    %258 = vmatprep.subr.mxu0 0.0
    %259 = vmatpush1.msra.mxu0 0.0
    %260 = vmatprep.subr.mxu0 0.0
    %261 = vmatpush1.msra.mxu0 0.0
    %262 = vmatprep.subr.mxu0 0.0
    %263 = vmatpush1.msra.mxu0 0.0
    %264 = vmatprep.subr.mxu0 0.0
    %265 = vmatpush1.msra.mxu0 0.0
    %266 = vmatprep.subr.mxu0 0.0
    %267 = vmatpush1.msra.mxu0 0.0
    %268 = vmatprep.subr.mxu0 0.0
    %269 = vmatpush1.msra.mxu0 0.0
    %270 = vmatprep.subr.mxu0 0.0
    %271 = vmatpush1.msra.mxu0 0.0
    %272 = vmatprep.subr.mxu0 0.0
    %273 = vmatpush1.msra.mxu0 0.0
    %274 = vmatprep.subr.mxu0 0.0
    %275 = vmatpush1.msra.mxu0 0.0
    %276 = vmatprep.subr.mxu0 0.0
    %277 = vmatpush1.msra.mxu0 0.0
    %278 = vmatprep.subr.mxu0 0.0
    %279 = vmatpush1.msra.mxu0 0.0
    %280 = vmatprep.mubr.f32.mxu0 0.0
    %281 = vmatmul.mubr.f32.gmra.mrb[0].mxu0 %v211
    %v282 = vpop.f32.mrb[0].mxu0
    %v283 = vadd.f32 0.0, %v282
    %v284 = vpop.f32.mrb[0].mxu0
    %285 = vdwg.mxu0
    %vm286 = vcmask 254976
    %287 = vst.msk [vmem:[#allocation6] sm:$0x3] %vm286, %v283
    // Predicated region
    $region22: #{tpu_custom_call.1} parent=1 // pred_check
      _
    $region23: #{tpu_custom_call.1} parent=1 // pred_check_branch
      %289 = sbr.rel (0) target = $region25
    $region24: #{tpu_custom_call.1} parent=1 // pred_region
      %s291 = ssub.s32 32, 32
      %292 = vsyncadd [#allocation5], %s291
      %s294 = sshll.u32 [#allocation6], 4
      %s295 = int_to_ptr.vmem [resolvable:$true] %s294
      %297 = dma.vmem_to_hbm [thread:$0]  %s295, 32, %s4, [#allocation5]
    $region25: #{tpu_custom_call.1} parent=1 // pred_fallthru
      _
    // Predicated region
    $region26: #{tpu_custom_call.1} parent=1 // pred_check
      _
    $region27: #{tpu_custom_call.1} parent=1 // pred_check_branch
      %299 = sbr.rel (0) target = $region29
    $region28: #{tpu_custom_call.1} parent=1 // pred_region
      %300 = dma.done [#allocation5], 32
    $region29: #{tpu_custom_call.1} parent=1 // pred_fallthru
      _
    %301 = vsyncpa [#allocation4], 1
    %302 = vsyncpa [#allocation5], 1

</llo_original>
